<compile_context>
chip_gen: v5e
topology: v5e:2x2
jax: 0.10.0
libtpu: 0.0.40
codegen_flags: <defaults>
</compile_context>

<pallas_src>
import functools

import jax
import jax.numpy as jnp
from jax.experimental import pallas as pl
from jax.experimental.pallas import tpu as pltpu

# ---------------- module configuration ----------------
INPUT_SIZE = 32
OUTPUT_SIZE = 32
CONTEXT_SIZE = 16
NUM_EXPERTS = 4
EXPERT_HIDDEN = 32
GATE_HIDDEN = 16
SHARED_HIDDEN = 32
GATE_ACTIVATION = "softmax"      # 'linear' or 'softmax'
TAU = 1.0
PACKED_H = NUM_EXPERTS * EXPERT_HIDDEN    # 128 (lane-dense packed expert hidden)


def _round_up(x, m):
    return ((x + m - 1) // m) * m


# ---------------- kernel ----------------
def _moa_kernel(gate_softmax, compute_dtype,
                emb_ref, ctx_ref,
                wg_ref, bg_ref,
                win_ref, bin_ref,
                expand_ref,
                we2_ref, be2_ref,
                out_ref):
    f32 = jnp.float32

    # Gate head. The module's gate network is Linear->Dropout->Linear with no
    # nonlinearity, so it was folded host-side into one [ctx, E] head (1/tau included).
    logits = jnp.dot(ctx_ref[...], wg_ref[...], preferred_element_type=f32) + bg_ref[...]
    if gate_softmax:
        m = jnp.max(logits, axis=-1, keepdims=True)
        e = jnp.exp(logits - m)
        gates = e * pl.reciprocal(jnp.sum(e, axis=-1, keepdims=True), approx=True)
    else:
        gates = logits                                       # [TB, E]
    gates_c = gates.astype(compute_dtype)

    # Expert layer 1, all experts packed side by side along lanes; the (linear) shared
    # adapter is folded host-side into win/bin. h1[:, e*He:(e+1)*He] = layer-1 out of expert e.
    h1 = jnp.dot(emb_ref[...], win_ref[...], preferred_element_type=f32) + bin_ref[...]

    # Gated sum (composition_mode='sum', top_k == num_experts):
    #   y = sum_e g_e * (h1_e @ we2_e + be2_e)
    #     = ((gates broadcast over packed lanes) * h1) @ we2_stack + gates @ be2_rows
    gates_wide = jnp.dot(gates_c, expand_ref[...], preferred_element_type=f32)   # [TB, E*He]
    weighted = (gates_wide * h1).astype(compute_dtype)
    y = jnp.dot(weighted, we2_ref[...], preferred_element_type=f32)
    y = y + jnp.dot(gates_c, be2_ref[...], preferred_element_type=f32)
    out_ref[...] = y.astype(out_ref.dtype)


# ---------------- host-side parameter packing ----------------
def pack_params(params, weight_dtype=jnp.bfloat16):
    """Fold the purely-linear module into lane-dense 2-D kernel operands (exact algebra)."""
    (tau, wg1, bg1, wg2, bg2, ws, bs, we1, be1, we2, be2) = params
    f32 = jnp.float32
    if GATE_ACTIVATION == "softmax":
        inv_tau = 1.0 / tau[0]
        wg2 = wg2 * inv_tau
        bg2 = bg2 * inv_tau
    # Gate MLP (Linear->Dropout->Linear, eval) folded into one head.
    wg = wg1 @ wg2                                            # [ctx, E]
    bg = bg1 @ wg2 + bg2                                      # [1, E]
    # Expert layer 1 packed [Hs, E*He]; shared adapter (Linear->Dropout, eval) folded in.
    we1_p = jnp.concatenate([we1[e] for e in range(NUM_EXPERTS)], axis=1)   # [Hs, E*He]
    be1_p = jnp.concatenate([be1[e] for e in range(NUM_EXPERTS)], axis=1)   # [1, E*He]
    w_in = ws @ we1_p                                         # [in, E*He]
    b_in = bs @ we1_p + be1_p                                 # [1, E*He]
    # Expert layer 2 stacked [E*He, Out] (== block_diag(we2) @ collapse, precomputed) + bias rows.
    we2_s = jnp.concatenate([we2[e] for e in range(NUM_EXPERTS)], axis=0)   # [E*He, Out]
    be2_r = jnp.concatenate([be2[e] for e in range(NUM_EXPERTS)], axis=0)   # [E, Out]
    # Constant 0/1 matrix broadcasting gates [B,E] -> packed lane layout [B, E*He].
    expand = jnp.kron(jnp.eye(NUM_EXPERTS, dtype=f32),
                      jnp.ones((1, EXPERT_HIDDEN), f32))                    # [E, E*He]
    return (wg.astype(weight_dtype), bg.astype(f32),
            w_in.astype(weight_dtype), b_in.astype(f32),
            expand.astype(weight_dtype),
            we2_s.astype(weight_dtype), be2_r.astype(weight_dtype))


# ---------------- wrapper ----------------
def moa_forward(embeddings, contexts, packed, *, max_tb=2048):
    """Full MixtureOfAdapters forward pass as one gridded Pallas kernel."""
    n = embeddings.shape[0]
    (wg, bg, w_in, b_in, expand, we2_s, be2_r) = packed
    act_dtype = wg.dtype
    # Stream activations at MXU dtype (bf16 by default) -> half the HBM bytes per row.
    embeddings = embeddings.astype(act_dtype)
    contexts = contexts.astype(act_dtype)

    # Batch tile: large enough to amortize per-grid-step overhead, but keep >= 2 grid
    # steps so both v7x TensorCores get work; rows are a multiple of 8 (sublane).
    # No host-side padding: the ragged last block is handled by the pipeline.
    # (max_tb=2048 keeps us well under v5e's 16 MiB default scoped VMEM; no vmem_limit needed.)
    tb = max(8, min(max_tb, _round_up(pl.cdiv(n, 2), 8)))
    grid = (pl.cdiv(n, tb),)

    def stream(feat):
        # TODO(synk): on v5e add pipeline_mode=pl.Buffered(3) if the input DMA is still exposed.
        return pl.BlockSpec((tb, feat), lambda i: (i, 0))

    def resident(arr):
        nd = arr.ndim
        return pl.BlockSpec(arr.shape, lambda i: (0,) * nd)   # same block every step -> stays in VMEM

    kernel = functools.partial(_moa_kernel, GATE_ACTIVATION == "softmax", act_dtype)

    grid_spec = pltpu.PrefetchScalarGridSpec(
        num_scalar_prefetch=0,
        grid=grid,
        in_specs=[
            stream(INPUT_SIZE),              # embeddings
            stream(CONTEXT_SIZE),            # contexts
            resident(wg), resident(bg),
            resident(w_in), resident(b_in),
            resident(expand),
            resident(we2_s), resident(be2_r),
        ],
        out_specs=pl.BlockSpec((tb, OUTPUT_SIZE), lambda i: (i, 0)),
    )
    return pl.pallas_call(
        kernel,
        out_shape=jax.ShapeDtypeStruct((n, OUTPUT_SIZE), jnp.float32),
        grid_spec=grid_spec,
        compiler_params=pltpu.CompilerParams(dimension_semantics=("parallel",)),
    )(embeddings, contexts, wg, bg, w_in, b_in, expand, we2_s, be2_r)


# ---------------- references ----------------
def moa_reference(embeddings, contexts, params):
    """Pure-JAX f32 reference matching the PyTorch module in eval mode (unpacked params)."""
    (tau, wg1, bg1, wg2, bg2, ws, bs, we1, be1, we2, be2) = params
    gh = contexts @ wg1 + bg1[0]
    logits = gh @ wg2 + bg2[0]
    if GATE_ACTIVATION == "softmax":
        gates = jax.nn.softmax(logits / tau[0], axis=-1)
    else:
        gates = logits
    h = embeddings @ ws + bs[0]
    expert_outputs = jnp.stack(
        [(h @ we1[e] + be1[e, 0]) @ we2[e] + be2[e, 0] for e in range(NUM_EXPERTS)], axis=1)
    return jnp.sum(gates[:, :, None] * expert_outputs, axis=1)


def moa_packed_reference(embeddings, contexts, packed):
    """Same math / same dtypes as the kernel (tight check; only the approx recip differs)."""
    (wg, bg, w_in, b_in, expand, we2_s, be2_r) = packed
    f32 = jnp.float32
    act = wg.dtype
    emb = embeddings.astype(act)
    ctx = contexts.astype(act)
    logits = jnp.dot(ctx, wg, preferred_element_type=f32) + bg
    gates = jax.nn.softmax(logits, axis=-1) if GATE_ACTIVATION == "softmax" else logits
    gates_c = gates.astype(act)
    h1 = jnp.dot(emb, w_in, preferred_element_type=f32) + b_in
    gates_wide = jnp.dot(gates_c, expand, preferred_element_type=f32)
    weighted = (gates_wide * h1).astype(act)
    y = jnp.dot(weighted, we2_s, preferred_element_type=f32)
    return y + jnp.dot(gates_c, be2_r, preferred_element_type=f32)


def init_params(key):
    ks = jax.random.split(key, 10)
    scale = 0.1
    wg1 = scale * jax.random.normal(ks[0], (CONTEXT_SIZE, GATE_HIDDEN), jnp.float32)
    bg1 = scale * jax.random.normal(ks[1], (1, GATE_HIDDEN), jnp.float32)
    wg2 = scale * jax.random.normal(ks[2], (GATE_HIDDEN, NUM_EXPERTS), jnp.float32)
    bg2 = scale * jax.random.normal(ks[3], (1, NUM_EXPERTS), jnp.float32)
    ws = scale * jax.random.normal(ks[4], (INPUT_SIZE, SHARED_HIDDEN), jnp.float32)
    bs = scale * jax.random.normal(ks[5], (1, SHARED_HIDDEN), jnp.float32)
    we1 = scale * jax.random.normal(ks[6], (NUM_EXPERTS, SHARED_HIDDEN, EXPERT_HIDDEN), jnp.float32)
    be1 = scale * jax.random.normal(ks[7], (NUM_EXPERTS, 1, EXPERT_HIDDEN), jnp.float32)
    we2 = scale * jax.random.normal(ks[8], (NUM_EXPERTS, EXPERT_HIDDEN, OUTPUT_SIZE), jnp.float32)
    be2 = scale * jax.random.normal(ks[9], (NUM_EXPERTS, 1, OUTPUT_SIZE), jnp.float32)
    tau = jnp.array([TAU], dtype=jnp.float32)
    return (tau, wg1, bg1, wg2, bg2, ws, bs, we1, be1, we2, be2)


if __name__ == "__main__":
    B = 200   # not a multiple of 8 or the tile -> exercises ragged last block + 2-step grid
    key = jax.random.PRNGKey(0)
    k_emb, k_ctx, k_par = jax.random.split(key, 3)
    embeddings = jax.random.normal(k_emb, (B, INPUT_SIZE), jnp.float32)
    contexts = jax.random.normal(k_ctx, (B, CONTEXT_SIZE), jnp.float32)
    params = init_params(k_par)
    packed = pack_params(params)              # bf16 MXU operands, f32 biases

    y = jax.block_until_ready(moa_forward(embeddings, contexts, packed))
    assert y.shape == (B, OUTPUT_SIZE) and y.dtype == jnp.float32

    # Tight check: kernel vs identical-math / identical-dtype pure-JAX pipeline
    # (only the EUP approx reciprocal in the softmax denominator differs).
    y_pk = moa_packed_reference(embeddings, contexts, packed)
    err_pk = jnp.max(jnp.abs(y - y_pk))
    assert jnp.allclose(y, y_pk, atol=5e-3, rtol=5e-3), f"packed-ref max abs err = {err_pk}"

    # Loose check: kernel (bf16 MXU operands) vs the full-precision module reference.
    y_ref = moa_reference(embeddings, contexts, params)
    err = jnp.max(jnp.abs(y - y_ref))
    assert jnp.allclose(y, y_ref, atol=2.5e-2, rtol=2.5e-2), f"f32-ref max abs err = {err}"

    print("KERNEL_OK")
</pallas_src>

<mosaic_0001>
module attributes {stable_mosaic.version = 11 : i64} {
  func.func @_moa_kernel(%arg0: i32, %arg1: memref<104x32xbf16, #tpu.memory_space<vmem>>, %arg2: memref<104x16xbf16, #tpu.memory_space<vmem>>, %arg3: memref<16x4xbf16, #tpu.memory_space<vmem>>, %arg4: memref<1x4xf32, #tpu.memory_space<vmem>>, %arg5: memref<32x128xbf16, #tpu.memory_space<vmem>>, %arg6: memref<1x128xf32, #tpu.memory_space<vmem>>, %arg7: memref<4x128xbf16, #tpu.memory_space<vmem>>, %arg8: memref<128x32xbf16, #tpu.memory_space<vmem>>, %arg9: memref<4x32xbf16, #tpu.memory_space<vmem>>, %arg10: memref<104x32xf32, #tpu.memory_space<vmem>>) attributes {dimension_semantics = [#tpu.dimension_semantics<parallel>], iteration_bounds = array<i64: 2>, scalar_prefetch = 0 : i64, scratch_operands = 0 : i64, tpu.core_type = #tpu.core_type<tc>, window_params = [{transform_indices = @transform_0, window_bounds = array<i64: 104, 32>}, {transform_indices = @transform_1, window_bounds = array<i64: 104, 16>}, {pipeline_mode = #tpu.pipeline_mode<synchronous>, transform_indices = @transform_2, window_bounds = array<i64: 16, 4>}, {pipeline_mode = #tpu.pipeline_mode<synchronous>, transform_indices = @transform_3, window_bounds = array<i64: 1, 4>}, {pipeline_mode = #tpu.pipeline_mode<synchronous>, transform_indices = @transform_4, window_bounds = array<i64: 32, 128>}, {pipeline_mode = #tpu.pipeline_mode<synchronous>, transform_indices = @transform_5, window_bounds = array<i64: 1, 128>}, {pipeline_mode = #tpu.pipeline_mode<synchronous>, transform_indices = @transform_6, window_bounds = array<i64: 4, 128>}, {pipeline_mode = #tpu.pipeline_mode<synchronous>, transform_indices = @transform_7, window_bounds = array<i64: 128, 32>}, {pipeline_mode = #tpu.pipeline_mode<synchronous>, transform_indices = @transform_8, window_bounds = array<i64: 4, 32>}, {transform_indices = @transform_9, window_bounds = array<i64: 104, 32>}]} {
    %c0 = arith.constant 0 : index
    %c0_0 = arith.constant 0 : index
    %0 = vector.load %arg2[%c0, %c0_0] : memref<104x16xbf16, #tpu.memory_space<vmem>>, vector<104x16xbf16>
    %c0_1 = arith.constant 0 : index
    %c0_2 = arith.constant 0 : index
    %1 = vector.load %arg3[%c0_1, %c0_2] : memref<16x4xbf16, #tpu.memory_space<vmem>>, vector<16x4xbf16>
    %cst = arith.constant dense<0.000000e+00> : vector<104x4xf32>
    %2 = tpu.matmul %0, %1, %cst {dimension_numbers = #tpu.dot_dimension_numbers<[1], [0], [0], [1], [0, 0, 1, 1], [], []>} : vector<104x16xbf16>, vector<16x4xbf16>, vector<104x4xf32> -> vector<104x4xf32>
    %c0_3 = arith.constant 0 : index
    %c0_4 = arith.constant 0 : index
    %3 = vector.load %arg4[%c0_3, %c0_4] : memref<1x4xf32, #tpu.memory_space<vmem>>, vector<1x4xf32>
    %4 = vector.broadcast %3 : vector<1x4xf32> to vector<104x4xf32>
    %5 = arith.addf %2, %4 : vector<104x4xf32>
    %cst_5 = arith.constant dense<0xFF800000> : vector<104xf32>
    %6 = vector.multi_reduction <maximumf>, %5, %cst_5 [1] : vector<104x4xf32> to vector<104xf32>
    %7 = vector.shape_cast %6 : vector<104xf32> to vector<104x1xf32>
    %8 = vector.broadcast %7 : vector<104x1xf32> to vector<104x4xf32>
    %9 = arith.subf %5, %8 : vector<104x4xf32>
    %10 = math.exp %9 : vector<104x4xf32>
    %cst_6 = arith.constant dense<0.000000e+00> : vector<104xf32>
    %11 = vector.multi_reduction <add>, %10, %cst_6 [1] : vector<104x4xf32> to vector<104xf32>
    %12 = vector.shape_cast %11 : vector<104xf32> to vector<104x1xf32>
    %13 = tpu.reciprocal %12 {approx = true} : vector<104x1xf32> -> vector<104x1xf32>
    %14 = vector.broadcast %13 : vector<104x1xf32> to vector<104x4xf32>
    %15 = arith.mulf %10, %14 : vector<104x4xf32>
    %16 = arith.truncf %15 : vector<104x4xf32> to vector<104x4xbf16>
    %c0_7 = arith.constant 0 : index
    %c0_8 = arith.constant 0 : index
    %17 = vector.load %arg1[%c0_7, %c0_8] : memref<104x32xbf16, #tpu.memory_space<vmem>>, vector<104x32xbf16>
    %c0_9 = arith.constant 0 : index
    %c0_10 = arith.constant 0 : index
    %18 = vector.load %arg5[%c0_9, %c0_10] : memref<32x128xbf16, #tpu.memory_space<vmem>>, vector<32x128xbf16>
    %cst_11 = arith.constant dense<0.000000e+00> : vector<104x128xf32>
    %19 = tpu.matmul %17, %18, %cst_11 {dimension_numbers = #tpu.dot_dimension_numbers<[1], [0], [0], [1], [0, 0, 1, 1], [], []>} : vector<104x32xbf16>, vector<32x128xbf16>, vector<104x128xf32> -> vector<104x128xf32>
    %c0_12 = arith.constant 0 : index
    %c0_13 = arith.constant 0 : index
    %20 = vector.load %arg6[%c0_12, %c0_13] : memref<1x128xf32, #tpu.memory_space<vmem>>, vector<1x128xf32>
    %21 = vector.broadcast %20 : vector<1x128xf32> to vector<104x128xf32>
    %22 = arith.addf %19, %21 : vector<104x128xf32>
    %c0_14 = arith.constant 0 : index
    %c0_15 = arith.constant 0 : index
    %23 = vector.load %arg7[%c0_14, %c0_15] : memref<4x128xbf16, #tpu.memory_space<vmem>>, vector<4x128xbf16>
    %cst_16 = arith.constant dense<0.000000e+00> : vector<104x128xf32>
    %24 = tpu.matmul %16, %23, %cst_16 {dimension_numbers = #tpu.dot_dimension_numbers<[1], [0], [0], [1], [0, 0, 1, 1], [], []>} : vector<104x4xbf16>, vector<4x128xbf16>, vector<104x128xf32> -> vector<104x128xf32>
    %25 = arith.mulf %24, %22 : vector<104x128xf32>
    %26 = arith.truncf %25 : vector<104x128xf32> to vector<104x128xbf16>
    %c0_17 = arith.constant 0 : index
    %c0_18 = arith.constant 0 : index
    %27 = vector.load %arg8[%c0_17, %c0_18] : memref<128x32xbf16, #tpu.memory_space<vmem>>, vector<128x32xbf16>
    %cst_19 = arith.constant dense<0.000000e+00> : vector<104x32xf32>
    %28 = tpu.matmul %26, %27, %cst_19 {dimension_numbers = #tpu.dot_dimension_numbers<[1], [0], [0], [1], [0, 0, 1, 1], [], []>} : vector<104x128xbf16>, vector<128x32xbf16>, vector<104x32xf32> -> vector<104x32xf32>
    %c0_20 = arith.constant 0 : index
    %c0_21 = arith.constant 0 : index
    %29 = vector.load %arg9[%c0_20, %c0_21] : memref<4x32xbf16, #tpu.memory_space<vmem>>, vector<4x32xbf16>
    %cst_22 = arith.constant dense<0.000000e+00> : vector<104x32xf32>
    %30 = tpu.matmul %16, %29, %cst_22 {dimension_numbers = #tpu.dot_dimension_numbers<[1], [0], [0], [1], [0, 0, 1, 1], [], []>} : vector<104x4xbf16>, vector<4x32xbf16>, vector<104x32xf32> -> vector<104x32xf32>
    %31 = arith.addf %28, %30 : vector<104x32xf32>
    %c0_23 = arith.constant 0 : index
    %c0_24 = arith.constant 0 : index
    %32 = vector.load %arg10[%c0_23, %c0_24] : memref<104x32xf32, #tpu.memory_space<vmem>>, vector<104x32xf32>
    tpu.vector_store %arg10[%c0_23, %c0_24], %31 {strides = array<i32>} : memref<104x32xf32, #tpu.memory_space<vmem>>, vector<104x32xf32>,
    return
  }
  func.func @transform_0(%arg0: i32) -> (i32, i32) {
    %c0_i32 = arith.constant 0 : i32
    %c0_i32_0 = arith.constant 0 : i32
    return %arg0, %c0_i32 : i32, i32
  }
  func.func @transform_1(%arg0: i32) -> (i32, i32) {
    %c0_i32 = arith.constant 0 : i32
    %c0_i32_0 = arith.constant 0 : i32
    return %arg0, %c0_i32 : i32, i32
  }
  func.func @transform_2(%arg0: i32) -> (i32, i32) {
    %c0_i32 = arith.constant 0 : i32
    %c0_i32_0 = arith.constant 0 : i32
    %c0_i32_1 = arith.constant 0 : i32
    return %c0_i32, %c0_i32_0 : i32, i32
  }
  func.func @transform_3(%arg0: i32) -> (i32, i32) {
    %c0_i32 = arith.constant 0 : i32
    %c0_i32_0 = arith.constant 0 : i32
    %c0_i32_1 = arith.constant 0 : i32
    return %c0_i32, %c0_i32_0 : i32, i32
  }
  func.func @transform_4(%arg0: i32) -> (i32, i32) {
    %c0_i32 = arith.constant 0 : i32
    %c0_i32_0 = arith.constant 0 : i32
    %c0_i32_1 = arith.constant 0 : i32
    return %c0_i32, %c0_i32_0 : i32, i32
  }
  func.func @transform_5(%arg0: i32) -> (i32, i32) {
    %c0_i32 = arith.constant 0 : i32
    %c0_i32_0 = arith.constant 0 : i32
    %c0_i32_1 = arith.constant 0 : i32
    return %c0_i32, %c0_i32_0 : i32, i32
  }
  func.func @transform_6(%arg0: i32) -> (i32, i32) {
    %c0_i32 = arith.constant 0 : i32
    %c0_i32_0 = arith.constant 0 : i32
    %c0_i32_1 = arith.constant 0 : i32
    return %c0_i32, %c0_i32_0 : i32, i32
  }
  func.func @transform_7(%arg0: i32) -> (i32, i32) {
    %c0_i32 = arith.constant 0 : i32
    %c0_i32_0 = arith.constant 0 : i32
    %c0_i32_1 = arith.constant 0 : i32
    return %c0_i32, %c0_i32_0 : i32, i32
  }
  func.func @transform_8(%arg0: i32) -> (i32, i32) {
    %c0_i32 = arith.constant 0 : i32
    %c0_i32_0 = arith.constant 0 : i32
    %c0_i32_1 = arith.constant 0 : i32
    return %c0_i32, %c0_i32_0 : i32, i32
  }
  func.func @transform_9(%arg0: i32) -> (i32, i32) {
    %c0_i32 = arith.constant 0 : i32
    %c0_i32_0 = arith.constant 0 : i32
    return %arg0, %c0_i32 : i32, i32
  }
}

</mosaic_0001>

<llo_original>
// kernel: tpu_custom_call.1
$region0: #{tpu_custom_call.1}
  #allocation0 [shape = 'u32[]', space=smem, size = 0x4, offset = 0x4, fixed_abs, tag = 'smem constant byte address 0x4 - core index']
  #allocation1 [shape = 'u32[72,128]{1,0:T(1,128)}', space=vmem, size = 0x9000, scoped, tag = 'internal scratch']
  %s0 = inlined_call_operand.vmem [shape: bf16[200,32], index: 0, kind: input, shape index: {}]
  %s1 = inlined_call_operand.vmem [shape: bf16[200,16], index: 1, kind: input, shape index: {}]
  %s2 = inlined_call_operand.vmem [shape: bf16[16,4], index: 2, kind: input, shape index: {}]
  %s3 = inlined_call_operand.vmem [shape: f32[1,4], index: 3, kind: input, shape index: {}]
  %s4 = inlined_call_operand.vmem [shape: bf16[32,128], index: 4, kind: input, shape index: {}]
  %s5 = inlined_call_operand.vmem [shape: f32[1,128], index: 5, kind: input, shape index: {}]
  %s6 = inlined_call_operand.vmem [shape: bf16[4,128], index: 6, kind: input, shape index: {}]
  %s7 = inlined_call_operand.vmem [shape: bf16[128,32], index: 7, kind: input, shape index: {}]
  %s8 = inlined_call_operand.vmem [shape: bf16[4,32], index: 8, kind: input, shape index: {}]
  %s9 = inlined_call_operand.vmem [shape: f32[200,32], index: 9, kind: output, shape index: {}]
  %s10 = sld [smem:[#allocation0]]
  $region117: #{tpu_custom_call.1} parent=0
    _
  %s12 = ssub.s32 1, %s10
  %s13 = scalar_select 0, %s12, %s10
  $region1: #{tpu_custom_call.1} parent=0
    #allocation2 [shape = 'u8[106496]{0}', space=vmem, size = 0x1a000, scoped, tag = 'output window, operand 0']
    loop: start=0, step=1, limit=4
    $region2: #{tpu_custom_call.1} parent=1 // loop_pre_header
      _
    $region3: #{tpu_custom_call.1} parent=1 // loop_header
      %s15 = sphi 0, %s19
      %p16 = scmp.ge.s32.totalorder %s15, 4
      %s25 = sphi 0, %s27
      %s28 = sphi 0, %s25
      %s29 = sphi 0, %s28
      %s45 = sphi 0, %s29
      %s51 = sphi 0, %s53
      %s54 = sphi 0, %s51
      %s55 = sphi 0, %s54
      %s71 = sphi 0, %s55
      %s75 = sphi 0, %s75
      %s77 = sphi 0, %s75
      %s78 = sphi 0, %s77
      %s92 = sphi 0, %s78
      %s96 = sphi 0, %s96
      %s98 = sphi 0, %s96
      %s99 = sphi 0, %s98
      %s113 = sphi 0, %s99
      %s117 = sphi 0, %s117
      %s119 = sphi 0, %s117
      %s120 = sphi 0, %s119
      %s134 = sphi 0, %s120
      %s138 = sphi 0, %s138
      %s140 = sphi 0, %s138
      %s141 = sphi 0, %s140
      %s155 = sphi 0, %s141
      %s159 = sphi 0, %s159
      %s161 = sphi 0, %s159
      %s162 = sphi 0, %s161
      %s176 = sphi 0, %s162
      %s180 = sphi 0, %s180
      %s182 = sphi 0, %s180
      %s183 = sphi 0, %s182
      %s197 = sphi 0, %s183
      %s201 = sphi 0, %s201
      %s203 = sphi 0, %s201
      %s204 = sphi 0, %s203
      %s218 = sphi 0, %s204
      %s224 = sphi 0, %s226
      %s227 = sphi 0, %s224
      %s228 = sphi 0, %s227
      %s244 = sphi 0, %s228
    $region4: #{tpu_custom_call.1} parent=1 // loop_header_branch
      %18 = sbr.rel (%p16) target = $region8
    $region5: #{tpu_custom_call.1} parent=1 // loop_body
      %s20 = ssub.s32 %s15, 1
      %s21 = ssub.s32 %s15, 2
      %s22 = sadd.s32 %s15, 1
      %s23 = ssub.s32 %s15, %s22
      %p24 = scmp.eq.s32.totalorder %s23, 0
      %s26 = sadd.s32 %s25, 1
      %s27 = scalar_select %p24, %s25, %s26
      %p30 = pneg %p24
      %p31 = scmp.eq.s32.totalorder %s15, 1
      %p32 = por %p30, %p31
      %p33 = scmp.ne.s32.totalorder %s25, %s28
      %p34 = scmp.eq.s32.totalorder %s15, 0
      %p35 = por %p33, %p34
      %p36 = scmp.ne.s32.totalorder %s25, %s28
      %p37 = scmp.eq.s32.totalorder %s20, 1
      %p38 = por %p36, %p37
      %p39 = scmp.ne.s32.totalorder %s28, %s29
      %p40 = scmp.eq.s32.totalorder %s20, 0
      %p41 = por %p39, %p40
      %p42 = scmp.ne.s32.totalorder %s28, %s29
      %p43 = scmp.eq.s32.totalorder %s21, 1
      %p44 = por %p42, %p43
      %p46 = scmp.ne.s32.totalorder %s29, %s45
      %p47 = scmp.eq.s32.totalorder %s21, 0
      %p48 = por %p46, %p47
      %s49 = ssub.s32 %s15, %s22
      %p50 = scmp.eq.s32.totalorder %s49, 0
      %s52 = sadd.s32 %s51, 1
      %s53 = scalar_select %p50, %s51, %s52
      %p56 = pneg %p50
      %p57 = scmp.eq.s32.totalorder %s15, 1
      %p58 = por %p56, %p57
      %p59 = scmp.ne.s32.totalorder %s51, %s54
      %p60 = scmp.eq.s32.totalorder %s15, 0
      %p61 = por %p59, %p60
      %p62 = scmp.ne.s32.totalorder %s51, %s54
      %p63 = scmp.eq.s32.totalorder %s20, 1
      %p64 = por %p62, %p63
      %p65 = scmp.ne.s32.totalorder %s54, %s55
      %p66 = scmp.eq.s32.totalorder %s20, 0
      %p67 = por %p65, %p66
      %p68 = scmp.ne.s32.totalorder %s54, %s55
      %p69 = scmp.eq.s32.totalorder %s21, 1
      %p70 = por %p68, %p69
      %p72 = scmp.ne.s32.totalorder %s55, %s71
      %p73 = scmp.eq.s32.totalorder %s21, 0
      %p74 = por %p72, %p73
      %s76 = sadd.s32 %s75, 1
      %p79 = scmp.eq.s32.totalorder %s15, 1
      %p80 = scmp.ne.s32.totalorder %s75, %s77
      %p81 = scmp.eq.s32.totalorder %s15, 0
      %p82 = por %p80, %p81
      %p83 = scmp.ne.s32.totalorder %s75, %s77
      %p84 = scmp.eq.s32.totalorder %s20, 1
      %p85 = por %p83, %p84
      %p86 = scmp.ne.s32.totalorder %s77, %s78
      %p87 = scmp.eq.s32.totalorder %s20, 0
      %p88 = por %p86, %p87
      %p89 = scmp.ne.s32.totalorder %s77, %s78
      %p90 = scmp.eq.s32.totalorder %s21, 1
      %p91 = por %p89, %p90
      %p93 = scmp.ne.s32.totalorder %s78, %s92
      %p94 = scmp.eq.s32.totalorder %s21, 0
      %p95 = por %p93, %p94
      %s97 = sadd.s32 %s96, 1
      %p100 = scmp.eq.s32.totalorder %s15, 1
      %p101 = scmp.ne.s32.totalorder %s96, %s98
      %p102 = scmp.eq.s32.totalorder %s15, 0
      %p103 = por %p101, %p102
      %p104 = scmp.ne.s32.totalorder %s96, %s98
      %p105 = scmp.eq.s32.totalorder %s20, 1
      %p106 = por %p104, %p105
      %p107 = scmp.ne.s32.totalorder %s98, %s99
      %p108 = scmp.eq.s32.totalorder %s20, 0
      %p109 = por %p107, %p108
      %p110 = scmp.ne.s32.totalorder %s98, %s99
      %p111 = scmp.eq.s32.totalorder %s21, 1
      %p112 = por %p110, %p111
      %p114 = scmp.ne.s32.totalorder %s99, %s113
      %p115 = scmp.eq.s32.totalorder %s21, 0
      %p116 = por %p114, %p115
      %s118 = sadd.s32 %s117, 1
      %p121 = scmp.eq.s32.totalorder %s15, 1
      %p122 = scmp.ne.s32.totalorder %s117, %s119
      %p123 = scmp.eq.s32.totalorder %s15, 0
      %p124 = por %p122, %p123
      %p125 = scmp.ne.s32.totalorder %s117, %s119
      %p126 = scmp.eq.s32.totalorder %s20, 1
      %p127 = por %p125, %p126
      %p128 = scmp.ne.s32.totalorder %s119, %s120
      %p129 = scmp.eq.s32.totalorder %s20, 0
      %p130 = por %p128, %p129
      %p131 = scmp.ne.s32.totalorder %s119, %s120
      %p132 = scmp.eq.s32.totalorder %s21, 1
      %p133 = por %p131, %p132
      %p135 = scmp.ne.s32.totalorder %s120, %s134
      %p136 = scmp.eq.s32.totalorder %s21, 0
      %p137 = por %p135, %p136
      %s139 = sadd.s32 %s138, 1
      %p142 = scmp.eq.s32.totalorder %s15, 1
      %p143 = scmp.ne.s32.totalorder %s138, %s140
      %p144 = scmp.eq.s32.totalorder %s15, 0
      %p145 = por %p143, %p144
      %p146 = scmp.ne.s32.totalorder %s138, %s140
      %p147 = scmp.eq.s32.totalorder %s20, 1
      %p148 = por %p146, %p147
      %p149 = scmp.ne.s32.totalorder %s140, %s141
      %p150 = scmp.eq.s32.totalorder %s20, 0
      %p151 = por %p149, %p150
      %p152 = scmp.ne.s32.totalorder %s140, %s141
      %p153 = scmp.eq.s32.totalorder %s21, 1
      %p154 = por %p152, %p153
      %p156 = scmp.ne.s32.totalorder %s141, %s155
      %p157 = scmp.eq.s32.totalorder %s21, 0
      %p158 = por %p156, %p157
      %s160 = sadd.s32 %s159, 1
      %p163 = scmp.eq.s32.totalorder %s15, 1
      %p164 = scmp.ne.s32.totalorder %s159, %s161
      %p165 = scmp.eq.s32.totalorder %s15, 0
      %p166 = por %p164, %p165
      %p167 = scmp.ne.s32.totalorder %s159, %s161
      %p168 = scmp.eq.s32.totalorder %s20, 1
      %p169 = por %p167, %p168
      %p170 = scmp.ne.s32.totalorder %s161, %s162
      %p171 = scmp.eq.s32.totalorder %s20, 0
      %p172 = por %p170, %p171
      %p173 = scmp.ne.s32.totalorder %s161, %s162
      %p174 = scmp.eq.s32.totalorder %s21, 1
      %p175 = por %p173, %p174
      %p177 = scmp.ne.s32.totalorder %s162, %s176
      %p178 = scmp.eq.s32.totalorder %s21, 0
      %p179 = por %p177, %p178
      %s181 = sadd.s32 %s180, 1
      %p184 = scmp.eq.s32.totalorder %s15, 1
      %p185 = scmp.ne.s32.totalorder %s180, %s182
      %p186 = scmp.eq.s32.totalorder %s15, 0
      %p187 = por %p185, %p186
      %p188 = scmp.ne.s32.totalorder %s180, %s182
      %p189 = scmp.eq.s32.totalorder %s20, 1
      %p190 = por %p188, %p189
      %p191 = scmp.ne.s32.totalorder %s182, %s183
      %p192 = scmp.eq.s32.totalorder %s20, 0
      %p193 = por %p191, %p192
      %p194 = scmp.ne.s32.totalorder %s182, %s183
      %p195 = scmp.eq.s32.totalorder %s21, 1
      %p196 = por %p194, %p195
      %p198 = scmp.ne.s32.totalorder %s183, %s197
      %p199 = scmp.eq.s32.totalorder %s21, 0
      %p200 = por %p198, %p199
      %s202 = sadd.s32 %s201, 1
      %p205 = scmp.eq.s32.totalorder %s15, 1
      %p206 = scmp.ne.s32.totalorder %s201, %s203
      %p207 = scmp.eq.s32.totalorder %s15, 0
      %p208 = por %p206, %p207
      %p209 = scmp.ne.s32.totalorder %s201, %s203
      %p210 = scmp.eq.s32.totalorder %s20, 1
      %p211 = por %p209, %p210
      %p212 = scmp.ne.s32.totalorder %s203, %s204
      %p213 = scmp.eq.s32.totalorder %s20, 0
      %p214 = por %p212, %p213
      %p215 = scmp.ne.s32.totalorder %s203, %s204
      %p216 = scmp.eq.s32.totalorder %s21, 1
      %p217 = por %p215, %p216
      %p219 = scmp.ne.s32.totalorder %s204, %s218
      %p220 = scmp.eq.s32.totalorder %s21, 0
      %p221 = por %p219, %p220
      %s222 = ssub.s32 %s15, %s22
      %p223 = scmp.eq.s32.totalorder %s222, 0
      %s225 = sadd.s32 %s224, 1
      %s226 = scalar_select %p223, %s224, %s225
      %p229 = pneg %p223
      %p230 = scmp.eq.s32.totalorder %s15, 1
      %p231 = por %p229, %p230
      %p232 = scmp.ne.s32.totalorder %s224, %s227
      %p233 = scmp.eq.s32.totalorder %s15, 0
      %p234 = por %p232, %p233
      %p235 = scmp.ne.s32.totalorder %s224, %s227
      %p236 = scmp.eq.s32.totalorder %s20, 1
      %p237 = por %p235, %p236
      %p238 = scmp.ne.s32.totalorder %s227, %s228
      %p239 = scmp.eq.s32.totalorder %s20, 0
      %p240 = por %p238, %p239
      %p241 = scmp.ne.s32.totalorder %s227, %s228
      %p242 = scmp.eq.s32.totalorder %s21, 1
      %p243 = por %p241, %p242
      %p245 = scmp.ne.s32.totalorder %s228, %s244
      %p246 = scmp.eq.s32.totalorder %s21, 0
      %p247 = por %p245, %p246
      %p248 = scmp.le.s32.totalorder 1, %s15
      %p249 = scmp.lt.s32.totalorder %s15, 3
      %p250 = pnand %p248, %p249
      %p251 = pneg %p250
      // Predicated region
      $region9: #{tpu_custom_call.1} parent=5 // pred_check
        _
      $region10: #{tpu_custom_call.1} parent=5 // pred_check_branch
        %253 = sbr.rel (%p250) target = $region12
      $region11: #{tpu_custom_call.1} parent=5 // pred_region
        %s254 = ssub.s32 %s15, 1
        // Predicated region
        $region13: #{tpu_custom_call.1} parent=11 // pred_check
          %p255 = pneg %p88
        $region14: #{tpu_custom_call.1} parent=11 // pred_check_branch
          %257 = sbr.rel (%p255) target = $region16
        $region15: #{tpu_custom_call.1} parent=11 // pred_region
          _
        $region16: #{tpu_custom_call.1} parent=11 // pred_fallthru
          _
        // Predicated region
        $region17: #{tpu_custom_call.1} parent=11 // pred_check
          %p258 = pneg %p109
        $region18: #{tpu_custom_call.1} parent=11 // pred_check_branch
          %260 = sbr.rel (%p258) target = $region20
        $region19: #{tpu_custom_call.1} parent=11 // pred_region
          _
        $region20: #{tpu_custom_call.1} parent=11 // pred_fallthru
          _
        // Predicated region
        $region21: #{tpu_custom_call.1} parent=11 // pred_check
          %p261 = pneg %p130
        $region22: #{tpu_custom_call.1} parent=11 // pred_check_branch
          %263 = sbr.rel (%p261) target = $region24
        $region23: #{tpu_custom_call.1} parent=11 // pred_region
          _
        $region24: #{tpu_custom_call.1} parent=11 // pred_fallthru
          _
        // Predicated region
        $region25: #{tpu_custom_call.1} parent=11 // pred_check
          %p264 = pneg %p151
        $region26: #{tpu_custom_call.1} parent=11 // pred_check_branch
          %266 = sbr.rel (%p264) target = $region28
        $region27: #{tpu_custom_call.1} parent=11 // pred_region
          _
        $region28: #{tpu_custom_call.1} parent=11 // pred_fallthru
          _
        // Predicated region
        $region29: #{tpu_custom_call.1} parent=11 // pred_check
          %p267 = pneg %p172
        $region30: #{tpu_custom_call.1} parent=11 // pred_check_branch
          %269 = sbr.rel (%p267) target = $region32
        $region31: #{tpu_custom_call.1} parent=11 // pred_region
          _
        $region32: #{tpu_custom_call.1} parent=11 // pred_fallthru
          _
        // Predicated region
        $region33: #{tpu_custom_call.1} parent=11 // pred_check
          %p270 = pneg %p193
        $region34: #{tpu_custom_call.1} parent=11 // pred_check_branch
          %272 = sbr.rel (%p270) target = $region36
        $region35: #{tpu_custom_call.1} parent=11 // pred_region
          _
        $region36: #{tpu_custom_call.1} parent=11 // pred_fallthru
          _
        // Predicated region
        $region37: #{tpu_custom_call.1} parent=11 // pred_check
          %p273 = pneg %p214
        $region38: #{tpu_custom_call.1} parent=11 // pred_check_branch
          %275 = sbr.rel (%p273) target = $region40
        $region39: #{tpu_custom_call.1} parent=11 // pred_region
          _
        $region40: #{tpu_custom_call.1} parent=11 // pred_fallthru
          _
      $region12: #{tpu_custom_call.1} parent=5 // pred_fallthru
        _
      %p276 = scmp.lt.s32.totalorder %s15, 2
      // Predicated region
      $region41: #{tpu_custom_call.1} parent=5 // pred_check
        %p277 = pneg %p276
      $region42: #{tpu_custom_call.1} parent=5 // pred_check_branch
        %279 = sbr.rel (%p277) target = $region44
      $region43: #{tpu_custom_call.1} parent=5 // pred_region
        // Predicated region
        $region45: #{tpu_custom_call.1} parent=43 // pred_check
          %p280 = pneg %p35
        $region46: #{tpu_custom_call.1} parent=43 // pred_check_branch
          %282 = sbr.rel (%p280) target = $region48
        $region47: #{tpu_custom_call.1} parent=43 // pred_region
          %s283 = smul.u32 13, %s15
          %s284 = ssub.s32 25, %s283
          %p285 = scmp.lt.s32.totalorder %s284, 13
          %s286 = scalar_select %p285, %s284, 13
          %s287 = smul.u32 4, %s286
          %p288 = scmp.lt.s32.totalorder %s283, 24
          %s289 = scalar_select %p288, %s283, 24
          %s290 = smul.addr %s289, 4
          %s291 = scalar_lea.vmem %s0, %s290
          %s292 = smul.u32 13, %s15
          %s293 = ssub.s32 25, %s292
          %p294 = scmp.lt.s32.totalorder %s293, 13
          %s295 = scalar_select %p294, %s293, 13
          %s296 = smul.u32 4, %s295
        $region48: #{tpu_custom_call.1} parent=43 // pred_fallthru
          _
        // Predicated region
        $region49: #{tpu_custom_call.1} parent=43 // pred_check
          %p297 = pneg %p61
        $region50: #{tpu_custom_call.1} parent=43 // pred_check_branch
          %299 = sbr.rel (%p297) target = $region52
        $region51: #{tpu_custom_call.1} parent=43 // pred_region
          %s300 = smul.u32 13, %s15
          %s301 = ssub.s32 25, %s300
          %p302 = scmp.lt.s32.totalorder %s301, 13
          %s303 = scalar_select %p302, %s301, 13
          %s304 = smul.u32 4, %s303
          %p305 = scmp.lt.s32.totalorder %s300, 24
          %s306 = scalar_select %p305, %s300, 24
          %s307 = smul.addr %s306, 4
          %s308 = scalar_lea.vmem %s1, %s307
          %s309 = smul.u32 13, %s15
          %s310 = ssub.s32 25, %s309
          %p311 = scmp.lt.s32.totalorder %s310, 13
          %s312 = scalar_select %p311, %s310, 13
          %s313 = smul.u32 4, %s312
        $region52: #{tpu_custom_call.1} parent=43 // pred_fallthru
          _
      $region44: #{tpu_custom_call.1} parent=5 // pred_fallthru
        _
      %p314 = scmp.le.s32.totalorder 1, %s15
      %p315 = scmp.lt.s32.totalorder %s15, 3
      %p316 = pnand %p314, %p315
      %p317 = pneg %p316
      // Predicated region
      $region53: #{tpu_custom_call.1} parent=5 // pred_check
        _
      $region54: #{tpu_custom_call.1} parent=5 // pred_check_branch
        %319 = sbr.rel (%p316) target = $region56
      $region55: #{tpu_custom_call.1} parent=5 // pred_region
        %s320 = ssub.s32 %s15, 1
        %s321 = smul.u32 13, %s20
        %s322 = ssub.s32 25, %s321
        %p323 = scmp.lt.s32.totalorder %s322, 13
        %s324 = scalar_select %p323, %s322, 13
        %s325 = smul.u32 4, %s324
        %p326 = scmp.lt.s32.totalorder %s321, 24
        %s327 = scalar_select %p326, %s321, 24
        %s328 = smul.addr %s327, 4
        %s329 = scalar_lea.vmem %s0, %s328
        %p330 = pneg %p41
        %p331 = pneg %p38
        %s332 = smul.u32 13, %s20
        %s333 = ssub.s32 25, %s332
        %p334 = scmp.lt.s32.totalorder %s333, 13
        %s335 = scalar_select %p334, %s333, 13
        %s336 = smul.u32 4, %s335
        %p337 = scmp.lt.s32.totalorder %s332, 24
        %s338 = scalar_select %p337, %s332, 24
        %s339 = smul.addr %s338, 4
        %s340 = scalar_lea.vmem %s1, %s339
        %p341 = pneg %p67
        %p342 = pneg %p64
        %p343 = pneg %p88
        %p344 = pneg %p85
        %p345 = pneg %p109
        %p346 = pneg %p106
        %p347 = pneg %p130
        %p348 = pneg %p127
        %p349 = pneg %p151
        %p350 = pneg %p148
        %p351 = pneg %p172
        %p352 = pneg %p169
        %p353 = pneg %p193
        %p354 = pneg %p190
        %p355 = pneg %p214
        %p356 = pneg %p211
        %p357 = pneg %p240
        %p358 = pneg %p237
        %s359 = sand.u32 %s227, 1
        %s360 = sand.u32 %s227, 1
        %s361 = smul.addr %s360, 104
        %s362 = scalar_lea.vmem [#allocation2], %s361
        %s363 = smul.u32 13, %s20
        %s364 = ssub.s32 25, %s363
        %p365 = scmp.lt.s32.totalorder %s364, 13
        %s366 = scalar_select %p365, %s364, 13
        %s367 = smul.u32 4, %s366
        %p368 = scmp.lt.s32.totalorder %s363, 24
        %s369 = scalar_select %p368, %s363, 24
        %s370 = smul.addr %s369, 4
        %s371 = scalar_lea.vmem %s0, %s370
        %s372 = smul.u32 13, %s20
        %s373 = ssub.s32 25, %s372
        %p374 = scmp.lt.s32.totalorder %s373, 13
        %s375 = scalar_select %p374, %s373, 13
        %s376 = smul.u32 4, %s375
        %s377 = smul.u32 13, %s20
        %s378 = ssub.s32 25, %s377
        %p379 = scmp.lt.s32.totalorder %s378, 13
        %s380 = scalar_select %p379, %s378, 13
        %s381 = smul.u32 4, %s380
        %p382 = scmp.lt.s32.totalorder %s377, 24
        %s383 = scalar_select %p382, %s377, 24
        %s384 = smul.addr %s383, 4
        %s385 = scalar_lea.vmem %s1, %s384
        %s386 = smul.u32 13, %s20
        %s387 = ssub.s32 25, %s386
        %p388 = scmp.lt.s32.totalorder %s387, 13
        %s389 = scalar_select %p388, %s387, 13
        %s390 = smul.u32 4, %s389
        %s391 = smul.u32 13, %s20
        %s392 = ssub.s32 25, %s391
        %p393 = scmp.lt.s32.totalorder %s392, 13
        %s394 = scalar_select %p393, %s392, 13
        %s395 = smul.u32 8, %s394
        %v397 = vld [vmem:[%s385] sm:$0xf]
        %v398 = vld [vmem:[%s385 + $0x4] sm:$0xf]
        %v399 = vld [vmem:[%s385 + $0x8] sm:$0xf]
        %v400 = vld [vmem:[%s385 + $0xc] sm:$0xf]
        %v401 = vld [vmem:[%s385 + $0x10] sm:$0xf]
        %v402 = vld [vmem:[%s385 + $0x14] sm:$0xf]
        %v403 = vld [vmem:[%s385 + $0x18] sm:$0xf]
        %v404 = vld [vmem:[%s385 + $0x1c] sm:$0xf]
        %v405 = vld [vmem:[%s385 + $0x20] sm:$0xf]
        %v406 = vld [vmem:[%s385 + $0x24] sm:$0xf]
        %v407 = vld [vmem:[%s385 + $0x28] sm:$0xf]
        %v408 = vld [vmem:[%s385 + $0x2c] sm:$0xf]
        %v409 = vld [vmem:[%s385 + $0x30] sm:$0xf]
        %v410 = vld [vmem:[%s2] sm:$0xf]
        %v411 = vld [vmem:[%s2 + $0x4] sm:$0xf]
        %v412 = vld [vmem:[%s3] sm:$0x1]
        %v414 = vperm.slane %v412, 0
        %v429 = vunpack.c.l.b16 %v397
        %v430 = vunpack.c.l.b16 %v398
        %v431 = vunpack.c.l.b16 %v399
        %v432 = vunpack.c.l.b16 %v400
        %v433 = vunpack.c.l.b16 %v401
        %v434 = vunpack.c.l.b16 %v402
        %v435 = vunpack.c.l.b16 %v403
        %v436 = vunpack.c.l.b16 %v404
        %v437 = vunpack.c.l.b16 %v405
        %v438 = vunpack.c.l.b16 %v406
        %v439 = vunpack.c.l.b16 %v407
        %v440 = vunpack.c.l.b16 %v408
        %v441 = vunpack.c.l.b16 %v409
        %v442 = vpack.c.b16 %v430, %v429
        %v443 = vpack.c.b16 %v432, %v431
        %v444 = vpack.c.b16 %v434, %v433
        %v445 = vpack.c.b16 %v436, %v435
        %v446 = vpack.c.b16 %v438, %v437
        %v447 = vpack.c.b16 %v440, %v439
        %v448 = vpack.c.b16 %v441, %v441
        %v451 = vunpack.c.l.b16 %v410
        %v452 = vunpack.c.l.b16 %v411
        %v453 = vpack.c.b16 %v452, %v451
        %vm455 = vcmask 130048
        %v457 = vsel %vm455, %v442, 0
        %v460 = vsel %vm455, %v443, 0
        %v463 = vsel %vm455, %v444, 0
        %v466 = vsel %vm455, %v445, 0
        %v469 = vsel %vm455, %v446, 0
        %v472 = vsel %vm455, %v447, 0
        %v475 = vsel %vm455, %v448, 0
        %477 = vmatpush.bf16.msra.mxu0 0
        %478 = vmatpush.bf16.msra.mxu0 0
        %479 = vmatpush.bf16.msra.mxu0 0
        %480 = vmatpush.bf16.msra.mxu0 0
        %481 = vmatpush.bf16.msra.mxu0 0
        %482 = vmatpush.bf16.msra.mxu0 0
        %483 = vmatpush.bf16.msra.mxu0 0
        %484 = vmatpush.bf16.msra.mxu0 %v453
        %485 = vmatmul.bf16.gmra.mxu0 %v457
        %v486 = vpop.f32.mrf.mxu0
        %v487 = vadd.f32 %v414, %v486
        %v488 = vpop.f32.mrf.mxu0
        %v489 = vadd.f32 %v414, %v488
        %490 = vmatmul.bf16.gmra.mxu0 %v460
        %v491 = vpop.f32.mrf.mxu0
        %v492 = vadd.f32 %v414, %v491
        %v493 = vpop.f32.mrf.mxu0
        %v494 = vadd.f32 %v414, %v493
        %495 = vmatmul.bf16.gmra.mxu0 %v463
        %v496 = vpop.f32.mrf.mxu0
        %v497 = vadd.f32 %v414, %v496
        %v498 = vpop.f32.mrf.mxu0
        %v499 = vadd.f32 %v414, %v498
        %500 = vmatmul.bf16.gmra.mxu0 %v466
        %v501 = vpop.f32.mrf.mxu0
        %v502 = vadd.f32 %v414, %v501
        %v503 = vpop.f32.mrf.mxu0
        %v504 = vadd.f32 %v414, %v503
        %505 = vmatmul.bf16.gmra.mxu0 %v469
        %v506 = vpop.f32.mrf.mxu0
        %v507 = vadd.f32 %v414, %v506
        %v508 = vpop.f32.mrf.mxu0
        %v509 = vadd.f32 %v414, %v508
        %510 = vmatmul.bf16.gmra.mxu0 %v472
        %v511 = vpop.f32.mrf.mxu0
        %v512 = vadd.f32 %v414, %v511
        %v513 = vpop.f32.mrf.mxu0
        %v514 = vadd.f32 %v414, %v513
        %515 = vmatmul.bf16.gmra.mxu0 %v475
        %v516 = vpop.f32.mrf.mxu0
        %v517 = vadd.f32 %v414, %v516
        %v518 = vpop.f32.mrf.mxu0
        %519 = vdwg.mxu0
        %vm520 = vcmask 31744
        %v521 = vsel %vm520, %v487, -inf
        %522 = vmax.xlane.f32.xlu0 %v521
        %v523 = vpop.xlane.xlu0 %522
        %v524 = vsel %vm520, %v489, -inf
        %525 = vmax.xlane.f32.xlu0 %v524
        %v526 = vpop.xlane.xlu0 %525
        %v527 = vsel %vm520, %v492, -inf
        %528 = vmax.xlane.f32.xlu0 %v527
        %v529 = vpop.xlane.xlu0 %528
        %v530 = vsel %vm520, %v494, -inf
        %531 = vmax.xlane.f32.xlu0 %v530
        %v532 = vpop.xlane.xlu0 %531
        %v533 = vsel %vm520, %v497, -inf
        %534 = vmax.xlane.f32.xlu0 %v533
        %v535 = vpop.xlane.xlu0 %534
        %v536 = vsel %vm520, %v499, -inf
        %537 = vmax.xlane.f32.xlu0 %v536
        %v538 = vpop.xlane.xlu0 %537
        %v539 = vsel %vm520, %v502, -inf
        %540 = vmax.xlane.f32.xlu0 %v539
        %v541 = vpop.xlane.xlu0 %540
        %v542 = vsel %vm520, %v504, -inf
        %543 = vmax.xlane.f32.xlu0 %v542
        %v544 = vpop.xlane.xlu0 %543
        %v545 = vsel %vm520, %v507, -inf
        %546 = vmax.xlane.f32.xlu0 %v545
        %v547 = vpop.xlane.xlu0 %546
        %v548 = vsel %vm520, %v509, -inf
        %549 = vmax.xlane.f32.xlu0 %v548
        %v550 = vpop.xlane.xlu0 %549
        %v551 = vsel %vm520, %v512, -inf
        %552 = vmax.xlane.f32.xlu0 %v551
        %v553 = vpop.xlane.xlu0 %552
        %v554 = vsel %vm520, %v514, -inf
        %555 = vmax.xlane.f32.xlu0 %v554
        %v556 = vpop.xlane.xlu0 %555
        %v557 = vsel %vm520, %v517, -inf
        %558 = vmax.xlane.f32.xlu0 %v557
        %v559 = vpop.xlane.xlu0 %558
        %v560 = vsub.f32 %v487, %v523
        %v561 = vsub.f32 %v489, %v526
        %v562 = vsub.f32 %v492, %v529
        %v563 = vsub.f32 %v494, %v532
        %v564 = vsub.f32 %v497, %v535
        %v565 = vsub.f32 %v499, %v538
        %v566 = vsub.f32 %v502, %v541
        %v567 = vsub.f32 %v504, %v544
        %v568 = vsub.f32 %v507, %v547
        %v569 = vsub.f32 %v509, %v550
        %v570 = vsub.f32 %v512, %v553
        %v571 = vsub.f32 %v514, %v556
        %v572 = vsub.f32 %v517, %v559
        %v573 = vmul.f32 %v560, 1.442695
        %v574 = vpow.pop %v573
        %v575 = vmul.f32 %v561, 1.442695
        %v576 = vpow.pop %v575
        %v577 = vmul.f32 %v562, 1.442695
        %v578 = vpow.pop %v577
        %v579 = vmul.f32 %v563, 1.442695
        %v580 = vpow.pop %v579
        %v581 = vmul.f32 %v564, 1.442695
        %v582 = vpow.pop %v581
        %v583 = vmul.f32 %v565, 1.442695
        %v584 = vpow.pop %v583
        %v585 = vmul.f32 %v566, 1.442695
        %v586 = vpow.pop %v585
        %v587 = vmul.f32 %v567, 1.442695
        %v588 = vpow.pop %v587
        %v589 = vmul.f32 %v568, 1.442695
        %v590 = vpow.pop %v589
        %v591 = vmul.f32 %v569, 1.442695
        %v592 = vpow.pop %v591
        %v593 = vmul.f32 %v570, 1.442695
        %v594 = vpow.pop %v593
        %v595 = vmul.f32 %v571, 1.442695
        %v596 = vpow.pop %v595
        %v597 = vmul.f32 %v572, 1.442695
        %v598 = vpow.pop %v597
        %v599 = vsel %vm520, %v574, 0.0
        %600 = vadd.xlane.f32.xlu0 %v599
        %v601 = vpop.xlane.xlu0 %600
        %v602 = vsel %vm520, %v576, 0.0
        %603 = vadd.xlane.f32.xlu0 %v602
        %v604 = vpop.xlane.xlu0 %603
        %v605 = vsel %vm520, %v578, 0.0
        %606 = vadd.xlane.f32.xlu0 %v605
        %v607 = vpop.xlane.xlu0 %606
        %v608 = vsel %vm520, %v580, 0.0
        %609 = vadd.xlane.f32.xlu0 %v608
        %v610 = vpop.xlane.xlu0 %609
        %v611 = vsel %vm520, %v582, 0.0
        %612 = vadd.xlane.f32.xlu0 %v611
        %v613 = vpop.xlane.xlu0 %612
        %v614 = vsel %vm520, %v584, 0.0
        %615 = vadd.xlane.f32.xlu0 %v614
        %v616 = vpop.xlane.xlu0 %615
        %v617 = vsel %vm520, %v586, 0.0
        %618 = vadd.xlane.f32.xlu0 %v617
        %v619 = vpop.xlane.xlu0 %618
        %v620 = vsel %vm520, %v588, 0.0
        %621 = vadd.xlane.f32.xlu0 %v620
        %v622 = vpop.xlane.xlu0 %621
        %v623 = vsel %vm520, %v590, 0.0
        %624 = vadd.xlane.f32.xlu0 %v623
        %v625 = vpop.xlane.xlu0 %624
        %v626 = vsel %vm520, %v592, 0.0
        %627 = vadd.xlane.f32.xlu0 %v626
        %v628 = vpop.xlane.xlu0 %627
        %v629 = vsel %vm520, %v594, 0.0
        %630 = vadd.xlane.f32.xlu0 %v629
        %v631 = vpop.xlane.xlu0 %630
        %v632 = vsel %vm520, %v596, 0.0
        %633 = vadd.xlane.f32.xlu0 %v632
        %v634 = vpop.xlane.xlu0 %633
        %v635 = vsel %vm520, %v598, 0.0
        %636 = vadd.xlane.f32.xlu0 %v635
        %v637 = vpop.xlane.xlu0 %636
        %v638 = vrcp.pop %v601
        %v639 = vrcp.pop %v604
        %v640 = vrcp.pop %v607
        %v641 = vrcp.pop %v610
        %v642 = vrcp.pop %v613
        %v643 = vrcp.pop %v616
        %v644 = vrcp.pop %v619
        %v645 = vrcp.pop %v622
        %v646 = vrcp.pop %v625
        %v647 = vrcp.pop %v628
        %v648 = vrcp.pop %v631
        %v649 = vrcp.pop %v634
        %v650 = vrcp.pop %v637
        %v651 = vmul.f32 %v574, %v638
        %v652 = vmul.f32 %v576, %v639
        %v653 = vmul.f32 %v578, %v640
        %v654 = vmul.f32 %v580, %v641
        %v655 = vmul.f32 %v582, %v642
        %v656 = vmul.f32 %v584, %v643
        %v657 = vmul.f32 %v586, %v644
        %v658 = vmul.f32 %v588, %v645
        %v659 = vmul.f32 %v590, %v646
        %v660 = vmul.f32 %v592, %v647
        %v661 = vmul.f32 %v594, %v648
        %v662 = vmul.f32 %v596, %v649
        %v663 = vmul.f32 %v598, %v650
        %v664 = vpack.c.bf16 %v652, %v651
        %v665 = vpack.c.bf16 %v654, %v653
        %v666 = vpack.c.bf16 %v656, %v655
        %v667 = vpack.c.bf16 %v658, %v657
        %v668 = vpack.c.bf16 %v660, %v659
        %v669 = vpack.c.bf16 %v662, %v661
        %v670 = vpack.c.bf16 %v663, %v663
        %v671 = vld [vmem:[%s371] sm:$0xf]
        %v672 = vld [vmem:[%s371 + $0x4] sm:$0xf]
        %v673 = vld [vmem:[%s371 + $0x8] sm:$0xf]
        %v674 = vld [vmem:[%s371 + $0xc] sm:$0xf]
        %v675 = vld [vmem:[%s371 + $0x10] sm:$0xf]
        %v676 = vld [vmem:[%s371 + $0x14] sm:$0xf]
        %v677 = vld [vmem:[%s371 + $0x18] sm:$0xf]
        %v678 = vld [vmem:[%s371 + $0x1c] sm:$0xf]
        %v679 = vld [vmem:[%s371 + $0x20] sm:$0xf]
        %v680 = vld [vmem:[%s371 + $0x24] sm:$0xf]
        %v681 = vld [vmem:[%s371 + $0x28] sm:$0xf]
        %v682 = vld [vmem:[%s371 + $0x2c] sm:$0xf]
        %v683 = vld [vmem:[%s371 + $0x30] sm:$0xf]
        %v684 = vld [vmem:[%s4] sm:$0xf]
        %v685 = vld [vmem:[%s4 + $0x4] sm:$0xf]
        %v686 = vld [vmem:[%s4 + $0x8] sm:$0xf]
        %v687 = vld [vmem:[%s4 + $0xc] sm:$0xf]
        %v688 = vld [vmem:[%s5] sm:$0x1]
        %v690 = vperm.slane %v688, 0
        %v705 = vunpack.c.l.b16 %v671
        %v706 = vunpack.c.l.b16 %v672
        %v707 = vunpack.c.l.b16 %v673
        %v708 = vunpack.c.l.b16 %v674
        %v709 = vunpack.c.l.b16 %v675
        %v710 = vunpack.c.l.b16 %v676
        %v711 = vunpack.c.l.b16 %v677
        %v712 = vunpack.c.l.b16 %v678
        %v713 = vunpack.c.l.b16 %v679
        %v714 = vunpack.c.l.b16 %v680
        %v715 = vunpack.c.l.b16 %v681
        %v716 = vunpack.c.l.b16 %v682
        %v717 = vunpack.c.l.b16 %v683
        %v718 = vpack.c.b16 %v706, %v705
        %v719 = vpack.c.b16 %v708, %v707
        %v720 = vpack.c.b16 %v710, %v709
        %v721 = vpack.c.b16 %v712, %v711
        %v722 = vpack.c.b16 %v714, %v713
        %v723 = vpack.c.b16 %v716, %v715
        %v724 = vpack.c.b16 %v717, %v717
        %v729 = vunpack.c.l.b16 %v684
        %v730 = vunpack.c.l.b16 %v685
        %v731 = vunpack.c.l.b16 %v686
        %v732 = vunpack.c.l.b16 %v687
        %v733 = vpack.c.b16 %v730, %v729
        %v734 = vpack.c.b16 %v732, %v731
        %vm737 = vcmask 261120
        %v739 = vsel %vm737, %v718, 0
        %v742 = vsel %vm737, %v719, 0
        %v745 = vsel %vm737, %v720, 0
        %v748 = vsel %vm737, %v721, 0
        %v751 = vsel %vm737, %v722, 0
        %v754 = vsel %vm737, %v723, 0
        %v757 = vsel %vm737, %v724, 0
        %759 = vmatpush.bf16.msra.mxu0 0
        %760 = vmatpush.bf16.msra.mxu0 0
        %761 = vmatpush.bf16.msra.mxu0 0
        %762 = vmatpush.bf16.msra.mxu0 0
        %763 = vmatpush.bf16.msra.mxu0 0
        %764 = vmatpush.bf16.msra.mxu0 0
        %765 = vmatpush.bf16.msra.mxu0 %v734
        %766 = vmatpush.bf16.msra.mxu0 %v733
        %767 = vmatmul.bf16.gmra.mxu0 %v739
        %v768 = vpop.f32.mrf.mxu0
        %v769 = vadd.f32 %v690, %v768
        %v770 = vpop.f32.mrf.mxu0
        %v771 = vadd.f32 %v690, %v770
        %772 = vmatmul.bf16.gmra.mxu0 %v742
        %v773 = vpop.f32.mrf.mxu0
        %v774 = vadd.f32 %v690, %v773
        %v775 = vpop.f32.mrf.mxu0
        %v776 = vadd.f32 %v690, %v775
        %777 = vmatmul.bf16.gmra.mxu0 %v745
        %v778 = vpop.f32.mrf.mxu0
        %v779 = vadd.f32 %v690, %v778
        %v780 = vpop.f32.mrf.mxu0
        %v781 = vadd.f32 %v690, %v780
        %782 = vmatmul.bf16.gmra.mxu0 %v748
        %v783 = vpop.f32.mrf.mxu0
        %v784 = vadd.f32 %v690, %v783
        %v785 = vpop.f32.mrf.mxu0
        %v786 = vadd.f32 %v690, %v785
        %787 = vmatmul.bf16.gmra.mxu0 %v751
        %v788 = vpop.f32.mrf.mxu0
        %v789 = vadd.f32 %v690, %v788
        %v790 = vpop.f32.mrf.mxu0
        %v791 = vadd.f32 %v690, %v790
        %792 = vmatmul.bf16.gmra.mxu0 %v754
        %v793 = vpop.f32.mrf.mxu0
        %v794 = vadd.f32 %v690, %v793
        %v795 = vpop.f32.mrf.mxu0
        %v796 = vadd.f32 %v690, %v795
        %797 = vmatmul.bf16.gmra.mxu0 %v757
        %v798 = vpop.f32.mrf.mxu0
        %v799 = vadd.f32 %v690, %v798
        %v800 = vpop.f32.mrf.mxu0
        %801 = vdwg.mxu0
        %v802 = vld [vmem:[%s6] sm:$0x3]
        %v804 = vsel %vm520, %v664, 0
        %v807 = vsel %vm520, %v665, 0
        %v810 = vsel %vm520, %v666, 0
        %v813 = vsel %vm520, %v667, 0
        %v816 = vsel %vm520, %v668, 0
        %v819 = vsel %vm520, %v669, 0
        %v822 = vsel %vm520, %v670, 0
        %vm824 = vcmask 1041408
        %v826 = vsel %vm824, %v802, 0
        %828 = vmatpush.bf16.msra.mxu0 0
        %829 = vmatpush.bf16.msra.mxu0 0
        %830 = vmatpush.bf16.msra.mxu0 0
        %831 = vmatpush.bf16.msra.mxu0 0
        %832 = vmatpush.bf16.msra.mxu0 0
        %833 = vmatpush.bf16.msra.mxu0 0
        %834 = vmatpush.bf16.msra.mxu0 0
        %835 = vmatpush.bf16.msra.mxu0 %v826
        %836 = vmatmul.bf16.gmra.mxu0 %v804
        %v837 = vpop.f32.mrf.mxu0
        %v838 = vadd.f32 0.0, %v837
        %v839 = vpop.f32.mrf.mxu0
        %v840 = vadd.f32 0.0, %v839
        %841 = vmatmul.bf16.gmra.mxu0 %v807
        %v842 = vpop.f32.mrf.mxu0
        %v843 = vadd.f32 0.0, %v842
        %v844 = vpop.f32.mrf.mxu0
        %v845 = vadd.f32 0.0, %v844
        %846 = vmatmul.bf16.gmra.mxu0 %v810
        %v847 = vpop.f32.mrf.mxu0
        %v848 = vadd.f32 0.0, %v847
        %v849 = vpop.f32.mrf.mxu0
        %v850 = vadd.f32 0.0, %v849
        %851 = vmatmul.bf16.gmra.mxu0 %v813
        %v852 = vpop.f32.mrf.mxu0
        %v853 = vadd.f32 0.0, %v852
        %v854 = vpop.f32.mrf.mxu0
        %v855 = vadd.f32 0.0, %v854
        %856 = vmatmul.bf16.gmra.mxu0 %v816
        %v857 = vpop.f32.mrf.mxu0
        %v858 = vadd.f32 0.0, %v857
        %v859 = vpop.f32.mrf.mxu0
        %v860 = vadd.f32 0.0, %v859
        %861 = vmatmul.bf16.gmra.mxu0 %v819
        %v862 = vpop.f32.mrf.mxu0
        %v863 = vadd.f32 0.0, %v862
        %v864 = vpop.f32.mrf.mxu0
        %v865 = vadd.f32 0.0, %v864
        %866 = vmatmul.bf16.gmra.mxu0 %v822
        %v867 = vpop.f32.mrf.mxu0
        %v868 = vadd.f32 0.0, %v867
        %v869 = vpop.f32.mrf.mxu0
        %870 = vdwg.mxu0
        %v871 = vmul.f32 %v838, %v769
        %v872 = vmul.f32 %v840, %v771
        %v873 = vmul.f32 %v843, %v774
        %v874 = vmul.f32 %v845, %v776
        %v875 = vmul.f32 %v848, %v779
        %v876 = vmul.f32 %v850, %v781
        %v877 = vmul.f32 %v853, %v784
        %v878 = vmul.f32 %v855, %v786
        %v879 = vmul.f32 %v858, %v789
        %v880 = vmul.f32 %v860, %v791
        %v881 = vmul.f32 %v863, %v794
        %v882 = vmul.f32 %v865, %v796
        %v883 = vmul.f32 %v868, %v799
        %v884 = vpack.c.bf16 %v872, %v871
        %v885 = vpack.c.bf16 %v874, %v873
        %v886 = vpack.c.bf16 %v876, %v875
        %v887 = vpack.c.bf16 %v878, %v877
        %v888 = vpack.c.bf16 %v880, %v879
        %v889 = vpack.c.bf16 %v882, %v881
        %v890 = vpack.c.bf16 %v883, %v883
        %v891 = vld [vmem:[%s7] sm:$0xf]
        %v892 = vld [vmem:[%s7 + $0x4] sm:$0xf]
        %v893 = vld [vmem:[%s7 + $0x8] sm:$0xf]
        %v894 = vld [vmem:[%s7 + $0xc] sm:$0xf]
        %v895 = vld [vmem:[%s7 + $0x10] sm:$0xf]
        %v896 = vld [vmem:[%s7 + $0x14] sm:$0xf]
        %v897 = vld [vmem:[%s7 + $0x18] sm:$0xf]
        %v898 = vld [vmem:[%s7 + $0x1c] sm:$0xf]
        %v899 = vld [vmem:[%s7 + $0x20] sm:$0xf]
        %v900 = vld [vmem:[%s7 + $0x24] sm:$0xf]
        %v901 = vld [vmem:[%s7 + $0x28] sm:$0xf]
        %v902 = vld [vmem:[%s7 + $0x2c] sm:$0xf]
        %v903 = vld [vmem:[%s7 + $0x30] sm:$0xf]
        %v904 = vld [vmem:[%s7 + $0x34] sm:$0xf]
        %v905 = vld [vmem:[%s7 + $0x38] sm:$0xf]
        %v906 = vld [vmem:[%s7 + $0x3c] sm:$0xf]
        %v907 = vld [vmem:[%s8] sm:$0x3]
        %v909 = vsel %vm824, %v907, 0
        %911 = vmatpush.bf16.msra.mxu0 0
        %912 = vmatpush.bf16.msra.mxu0 0
        %913 = vmatpush.bf16.msra.mxu0 0
        %914 = vmatpush.bf16.msra.mxu0 0
        %915 = vmatpush.bf16.msra.mxu0 0
        %916 = vmatpush.bf16.msra.mxu0 0
        %917 = vmatpush.bf16.msra.mxu0 0
        %918 = vmatpush.bf16.msra.mxu0 %v909
        %919 = vmatmul.bf16.gmra.mxu0 %v804
        %v920 = vpop.f32.mrf.mxu0
        %v921 = vadd.f32 0.0, %v920
        %v922 = vpop.f32.mrf.mxu0
        %v923 = vadd.f32 0.0, %v922
        %924 = vmatmul.bf16.gmra.mxu0 %v807
        %v925 = vpop.f32.mrf.mxu0
        %v926 = vadd.f32 0.0, %v925
        %v927 = vpop.f32.mrf.mxu0
        %v928 = vadd.f32 0.0, %v927
        %929 = vmatmul.bf16.gmra.mxu0 %v810
        %v930 = vpop.f32.mrf.mxu0
        %v931 = vadd.f32 0.0, %v930
        %v932 = vpop.f32.mrf.mxu0
        %v933 = vadd.f32 0.0, %v932
        %934 = vmatmul.bf16.gmra.mxu0 %v813
        %v935 = vpop.f32.mrf.mxu0
        %v936 = vadd.f32 0.0, %v935
        %v937 = vpop.f32.mrf.mxu0
        %v938 = vadd.f32 0.0, %v937
        %939 = vmatmul.bf16.gmra.mxu0 %v816
        %v940 = vpop.f32.mrf.mxu0
        %v941 = vadd.f32 0.0, %v940
        %v942 = vpop.f32.mrf.mxu0
        %v943 = vadd.f32 0.0, %v942
        %944 = vmatmul.bf16.gmra.mxu0 %v819
        %v945 = vpop.f32.mrf.mxu0
        %v946 = vadd.f32 0.0, %v945
        %v947 = vpop.f32.mrf.mxu0
        %v948 = vadd.f32 0.0, %v947
        %949 = vmatmul.bf16.gmra.mxu0 %v822
        %v950 = vpop.f32.mrf.mxu0
        %v951 = vadd.f32 0.0, %v950
        %v952 = vpop.f32.mrf.mxu0
        %953 = vdwg.mxu0
        %v970 = vunpack.c.l.b16 %v891
        %v971 = vunpack.c.l.b16 %v892
        %v972 = vunpack.c.l.b16 %v893
        %v973 = vunpack.c.l.b16 %v894
        %v974 = vunpack.c.l.b16 %v895
        %v975 = vunpack.c.l.b16 %v896
        %v976 = vunpack.c.l.b16 %v897
        %v977 = vunpack.c.l.b16 %v898
        %v978 = vunpack.c.l.b16 %v899
        %v979 = vunpack.c.l.b16 %v900
        %v980 = vunpack.c.l.b16 %v901
        %v981 = vunpack.c.l.b16 %v902
        %v982 = vunpack.c.l.b16 %v903
        %v983 = vunpack.c.l.b16 %v904
        %v984 = vunpack.c.l.b16 %v905
        %v985 = vunpack.c.l.b16 %v906
        %v986 = vpack.c.b16 %v971, %v970
        %v987 = vpack.c.b16 %v973, %v972
        %v988 = vpack.c.b16 %v975, %v974
        %v989 = vpack.c.b16 %v977, %v976
        %v990 = vpack.c.b16 %v979, %v978
        %v991 = vpack.c.b16 %v981, %v980
        %v992 = vpack.c.b16 %v983, %v982
        %v993 = vpack.c.b16 %v985, %v984
        %1002 = vmatpush.bf16.msra.mxu0 %v993
        %1003 = vmatpush.bf16.msra.mxu0 %v992
        %1004 = vmatpush.bf16.msra.mxu0 %v991
        %1005 = vmatpush.bf16.msra.mxu0 %v990
        %1006 = vmatpush.bf16.msra.mxu0 %v989
        %1007 = vmatpush.bf16.msra.mxu0 %v988
        %1008 = vmatpush.bf16.msra.mxu0 %v987
        %1009 = vmatpush.bf16.msra.mxu0 %v986
        %1010 = vmatmul.bf16.gmra.mxu0 %v884
        %v1011 = vpop.f32.mrf.mxu0
        %v1012 = vadd.f32 %v921, %v1011
        %v1013 = vpop.f32.mrf.mxu0
        %v1014 = vadd.f32 %v923, %v1013
        %1015 = vmatmul.bf16.gmra.mxu0 %v885
        %v1016 = vpop.f32.mrf.mxu0
        %v1017 = vadd.f32 %v926, %v1016
        %v1018 = vpop.f32.mrf.mxu0
        %v1019 = vadd.f32 %v928, %v1018
        %1020 = vmatmul.bf16.gmra.mxu0 %v886
        %v1021 = vpop.f32.mrf.mxu0
        %v1022 = vadd.f32 %v931, %v1021
        %v1023 = vpop.f32.mrf.mxu0
        %v1024 = vadd.f32 %v933, %v1023
        %1025 = vmatmul.bf16.gmra.mxu0 %v887
        %v1026 = vpop.f32.mrf.mxu0
        %v1027 = vadd.f32 %v936, %v1026
        %v1028 = vpop.f32.mrf.mxu0
        %v1029 = vadd.f32 %v938, %v1028
        %1030 = vmatmul.bf16.gmra.mxu0 %v888
        %v1031 = vpop.f32.mrf.mxu0
        %v1032 = vadd.f32 %v941, %v1031
        %v1033 = vpop.f32.mrf.mxu0
        %v1034 = vadd.f32 %v943, %v1033
        %1035 = vmatmul.bf16.gmra.mxu0 %v889
        %v1036 = vpop.f32.mrf.mxu0
        %v1037 = vadd.f32 %v946, %v1036
        %v1038 = vpop.f32.mrf.mxu0
        %v1039 = vadd.f32 %v948, %v1038
        %1040 = vmatmul.bf16.gmra.mxu0 %v890
        %v1041 = vpop.f32.mrf.mxu0
        %v1042 = vadd.f32 %v951, %v1041
        %v1043 = vpop.f32.mrf.mxu0
        %1044 = vdwg.mxu0
        %1045 = vst.msk [vmem:[%s362] sm:$0xff] %vm737, %v1012
        %1046 = vst.msk [vmem:[%s362 + $0x8] sm:$0xff] %vm737, %v1014
        %1047 = vst.msk [vmem:[%s362 + $0x10] sm:$0xff] %vm737, %v1017
        %1048 = vst.msk [vmem:[%s362 + $0x18] sm:$0xff] %vm737, %v1019
        %1049 = vst.msk [vmem:[%s362 + $0x20] sm:$0xff] %vm737, %v1022
        %1050 = vst.msk [vmem:[%s362 + $0x28] sm:$0xff] %vm737, %v1024
        %1051 = vst.msk [vmem:[%s362 + $0x30] sm:$0xff] %vm737, %v1027
        %1052 = vst.msk [vmem:[%s362 + $0x38] sm:$0xff] %vm737, %v1029
        %1053 = vst.msk [vmem:[%s362 + $0x40] sm:$0xff] %vm737, %v1032
        %1054 = vst.msk [vmem:[%s362 + $0x48] sm:$0xff] %vm737, %v1034
        %1055 = vst.msk [vmem:[%s362 + $0x50] sm:$0xff] %vm737, %v1037
        %1056 = vst.msk [vmem:[%s362 + $0x58] sm:$0xff] %vm737, %v1039
        %1057 = vst.msk [vmem:[%s362 + $0x60] sm:$0xff] %vm737, %v1042
        %s1058 = sand.u32 %s227, 1
        %s1059 = sand.u32 %s227, 1
        %s1060 = smul.addr %s1059, 104
        %s1061 = scalar_lea.vmem [#allocation2], %s1060
        // Predicated region
        $region57: #{tpu_custom_call.1} parent=55 // pred_check
          %p1062 = pneg %p237
        $region58: #{tpu_custom_call.1} parent=55 // pred_check_branch
          %1064 = sbr.rel (%p1062) target = $region60
        $region59: #{tpu_custom_call.1} parent=55 // pred_region
          %s1065 = smul.u32 13, %s20
          %s1066 = ssub.s32 25, %s1065
          %p1067 = scmp.lt.s32.totalorder %s1066, 13
          %s1068 = scalar_select %p1067, %s1066, 13
          %s1069 = smul.u32 8, %s1068
          %p1070 = scmp.ne.s32.totalorder 0, %s1069
          %s1071 = smul.addr %s1065, 8
          %s1072 = scalar_lea.vmem %s9, %s1071
          // Predicated region
          $region61: #{tpu_custom_call.1} parent=59 // pred_check
            %p1073 = pneg %p1070
          $region62: #{tpu_custom_call.1} parent=59 // pred_check_branch
            %1075 = sbr.rel (%p1073) target = $region64
          $region63: #{tpu_custom_call.1} parent=59 // pred_region
            // Predicated region
            $region65: #{tpu_custom_call.1} parent=63 // pred_check
              _
            $region66: #{tpu_custom_call.1} parent=63 // pred_check_branch
              %1077 = sbr.rel (0) target = $region68
            $region67: #{tpu_custom_call.1} parent=63 // pred_region
              // Predicated region
              $region87: #{tpu_custom_call.1} parent=67 // pred_check
                _
              $region88: #{tpu_custom_call.1} parent=67 // pred_check_branch
                %1152 = sbr.rel (0) target = $region90
              $region89: #{tpu_custom_call.1} parent=67 // pred_region
                %s1153 = sdiv.u32.pop %s1068, 13
                %s1154 = srem.u32.pop %s1068, 13
                // While loop
                $region91: #{tpu_custom_call.1} parent=89 // loop_pre_header
                  _
                $region92: #{tpu_custom_call.1} parent=89 // loop_header
                  %s1156 = sphi 0, %s1158
                  %p1157 = scmp.ge.s32.totalorder %s1156, %s1153
                  %s1161 = sphi 0, %s1192
                  %s1162 = sphi %s1061, %s1195
                  %s1163 = sphi %s1072, %s1196
                $region93: #{tpu_custom_call.1} parent=89 // loop_header_branch
                  %1160 = sbr.rel (%p1157) target = $region97
                $region94: #{tpu_custom_call.1} parent=89 // loop_body
                  %v1164 = vld [vmem:[%s1162] sm:$0xff]
                  %1165 = vst [vmem:[%s1163] sm:$0xff] %v1164
                  %v1166 = vld [vmem:[%s1162 + $0x8] sm:$0xff]
                  %1167 = vst [vmem:[%s1163 + $0x8] sm:$0xff] %v1166
                  %v1168 = vld [vmem:[%s1162 + $0x10] sm:$0xff]
                  %1169 = vst [vmem:[%s1163 + $0x10] sm:$0xff] %v1168
                  %v1170 = vld [vmem:[%s1162 + $0x18] sm:$0xff]
                  %1171 = vst [vmem:[%s1163 + $0x18] sm:$0xff] %v1170
                  %v1172 = vld [vmem:[%s1162 + $0x20] sm:$0xff]
                  %1173 = vst [vmem:[%s1163 + $0x20] sm:$0xff] %v1172
                  %v1174 = vld [vmem:[%s1162 + $0x28] sm:$0xff]
                  %1175 = vst [vmem:[%s1163 + $0x28] sm:$0xff] %v1174
                  %v1176 = vld [vmem:[%s1162 + $0x30] sm:$0xff]
                  %1177 = vst [vmem:[%s1163 + $0x30] sm:$0xff] %v1176
                  %v1178 = vld [vmem:[%s1162 + $0x38] sm:$0xff]
                  %1179 = vst [vmem:[%s1163 + $0x38] sm:$0xff] %v1178
                  %v1180 = vld [vmem:[%s1162 + $0x40] sm:$0xff]
                  %1181 = vst [vmem:[%s1163 + $0x40] sm:$0xff] %v1180
                  %v1182 = vld [vmem:[%s1162 + $0x48] sm:$0xff]
                  %1183 = vst [vmem:[%s1163 + $0x48] sm:$0xff] %v1182
                  %v1184 = vld [vmem:[%s1162 + $0x50] sm:$0xff]
                  %1185 = vst [vmem:[%s1163 + $0x50] sm:$0xff] %v1184
                  %v1186 = vld [vmem:[%s1162 + $0x58] sm:$0xff]
                  %1187 = vst [vmem:[%s1163 + $0x58] sm:$0xff] %v1186
                  %v1188 = vld [vmem:[%s1162 + $0x60] sm:$0xff]
                  %1189 = vst [vmem:[%s1163 + $0x60] sm:$0xff] %v1188
                  %s1190 = sadd.s32 1, %s1161
                  %p1191 = scmp.ge.s32.totalorder %s1190, %s1153
                  %s1192 = scalar_select %p1191, 0, %s1190
                  %s1193 = smul.u32 %s1192, 104
                  %s1194 = smul.u32 %s1192, 104
                  %s1195 = scalar_lea.vmem %s1061, %s1193 [#allocation2]
                  %s1196 = scalar_lea.vmem %s1072, %s1194
                $region95: #{tpu_custom_call.1} parent=89 // loop_footer
                  %s1158 = sadd.s32 %s1156, 1
                $region96: #{tpu_custom_call.1} parent=89 // loop_footer_branch
                  %1155 = sbr.rel target = $region92
                $region97: #{tpu_custom_call.1} parent=89 // loop_exit
                  _
                %s1197 = sdiv.u32.pop %s1068, 13
                %s1198 = srem.u32.pop %s1068, 13
                %s1199 = smul.u32 %s1197, 13
                %s1200 = smul.u32 8, %s1199
                %s1201 = scalar_lea.vmem %s1061, %s1200 [#allocation2]
                %s1202 = smul.u32 8, %s1199
                %s1203 = scalar_lea.vmem %s1072, %s1202
                // While loop
                $region98: #{tpu_custom_call.1} parent=89 // loop_pre_header
                  _
                $region99: #{tpu_custom_call.1} parent=89 // loop_header
                  %s1205 = sphi 0, %s1207
                  %p1206 = scmp.ge.s32.totalorder %s1205, %s1198
                  %s1210 = sphi 0, %s1217
                  %s1211 = sphi %s1201, %s1220
                  %s1212 = sphi %s1203, %s1221
                $region100: #{tpu_custom_call.1} parent=89 // loop_header_branch
                  %1209 = sbr.rel (%p1206) target = $region104
                $region101: #{tpu_custom_call.1} parent=89 // loop_body
                  %v1213 = vld [vmem:[%s1211] sm:$0xff]
                  %1214 = vst [vmem:[%s1212] sm:$0xff] %v1213
                  %s1215 = sadd.s32 1, %s1210
                  %p1216 = scmp.ge.s32.totalorder %s1215, %s1198
                  %s1217 = scalar_select %p1216, 0, %s1215
                  %s1218 = smul.u32 %s1217, 8
                  %s1219 = smul.u32 %s1217, 8
                  %s1220 = scalar_lea.vmem %s1201, %s1218 [#allocation2]
                  %s1221 = scalar_lea.vmem %s1203, %s1219
                $region102: #{tpu_custom_call.1} parent=89 // loop_footer
                  %s1207 = sadd.s32 %s1205, 1
                $region103: #{tpu_custom_call.1} parent=89 // loop_footer_branch
                  %1204 = sbr.rel target = $region99
                $region104: #{tpu_custom_call.1} parent=89 // loop_exit
                  _
              $region90: #{tpu_custom_call.1} parent=67 // pred_fallthru
                _
              // Predicated region
              $region105: #{tpu_custom_call.1} parent=67 // pred_check
                _
              $region106: #{tpu_custom_call.1} parent=67 // pred_check_branch
                %1223 = sbr.rel target = $region108
              $region107: #{tpu_custom_call.1} parent=67 // pred_region
                _
              $region108: #{tpu_custom_call.1} parent=67 // pred_fallthru
                _
            $region68: #{tpu_custom_call.1} parent=63 // pred_fallthru
              _
            // Predicated region
            $region69: #{tpu_custom_call.1} parent=63 // pred_check
              _
            $region70: #{tpu_custom_call.1} parent=63 // pred_check_branch
              %1079 = sbr.rel target = $region72
            $region71: #{tpu_custom_call.1} parent=63 // pred_region
              %s1081 = ssub.s32 256, 1
              %s1082 = sdiv.u32.pop %s1068, 13
              %s1083 = srem.u32.pop %s1068, 13
              // While loop
              $region73: #{tpu_custom_call.1} parent=71 // loop_pre_header
                _
              $region74: #{tpu_custom_call.1} parent=71 // loop_header
                %s1085 = sphi 0, %s1087
                %p1086 = scmp.ge.s32.totalorder %s1085, %s1082
                %s1090 = sphi 0, %s1121
                %s1091 = sphi %s1061, %s1124
                %s1092 = sphi %s1072, %s1125
              $region75: #{tpu_custom_call.1} parent=71 // loop_header_branch
                %1089 = sbr.rel (%p1086) target = $region79
              $region76: #{tpu_custom_call.1} parent=71 // loop_body
                %v1093 = vld [vmem:[%s1091] sm:%s1081]
                %1094 = vst [vmem:[%s1092] sm:%s1081] %v1093
                %v1095 = vld [vmem:[%s1091 + $0x8] sm:%s1081]
                %1096 = vst [vmem:[%s1092 + $0x8] sm:%s1081] %v1095
                %v1097 = vld [vmem:[%s1091 + $0x10] sm:%s1081]
                %1098 = vst [vmem:[%s1092 + $0x10] sm:%s1081] %v1097
                %v1099 = vld [vmem:[%s1091 + $0x18] sm:%s1081]
                %1100 = vst [vmem:[%s1092 + $0x18] sm:%s1081] %v1099
                %v1101 = vld [vmem:[%s1091 + $0x20] sm:%s1081]
                %1102 = vst [vmem:[%s1092 + $0x20] sm:%s1081] %v1101
                %v1103 = vld [vmem:[%s1091 + $0x28] sm:%s1081]
                %1104 = vst [vmem:[%s1092 + $0x28] sm:%s1081] %v1103
                %v1105 = vld [vmem:[%s1091 + $0x30] sm:%s1081]
                %1106 = vst [vmem:[%s1092 + $0x30] sm:%s1081] %v1105
                %v1107 = vld [vmem:[%s1091 + $0x38] sm:%s1081]
                %1108 = vst [vmem:[%s1092 + $0x38] sm:%s1081] %v1107
                %v1109 = vld [vmem:[%s1091 + $0x40] sm:%s1081]
                %1110 = vst [vmem:[%s1092 + $0x40] sm:%s1081] %v1109
                %v1111 = vld [vmem:[%s1091 + $0x48] sm:%s1081]
                %1112 = vst [vmem:[%s1092 + $0x48] sm:%s1081] %v1111
                %v1113 = vld [vmem:[%s1091 + $0x50] sm:%s1081]
                %1114 = vst [vmem:[%s1092 + $0x50] sm:%s1081] %v1113
                %v1115 = vld [vmem:[%s1091 + $0x58] sm:%s1081]
                %1116 = vst [vmem:[%s1092 + $0x58] sm:%s1081] %v1115
                %v1117 = vld [vmem:[%s1091 + $0x60] sm:%s1081]
                %1118 = vst [vmem:[%s1092 + $0x60] sm:%s1081] %v1117
                %s1119 = sadd.s32 1, %s1090
                %p1120 = scmp.ge.s32.totalorder %s1119, %s1082
                %s1121 = scalar_select %p1120, 0, %s1119
                %s1122 = smul.u32 %s1121, 104
                %s1123 = smul.u32 %s1121, 104
                %s1124 = scalar_lea.vmem %s1061, %s1122 [#allocation2]
                %s1125 = scalar_lea.vmem %s1072, %s1123
              $region77: #{tpu_custom_call.1} parent=71 // loop_footer
                %s1087 = sadd.s32 %s1085, 1
              $region78: #{tpu_custom_call.1} parent=71 // loop_footer_branch
                %1084 = sbr.rel target = $region74
              $region79: #{tpu_custom_call.1} parent=71 // loop_exit
                _
              %s1126 = sdiv.u32.pop %s1068, 13
              %s1127 = srem.u32.pop %s1068, 13
              %s1128 = smul.u32 %s1126, 13
              %s1129 = smul.u32 8, %s1128
              %s1130 = scalar_lea.vmem %s1061, %s1129 [#allocation2]
              %s1131 = smul.u32 8, %s1128
              %s1132 = scalar_lea.vmem %s1072, %s1131
              // While loop
              $region80: #{tpu_custom_call.1} parent=71 // loop_pre_header
                _
              $region81: #{tpu_custom_call.1} parent=71 // loop_header
                %s1134 = sphi 0, %s1136
                %p1135 = scmp.ge.s32.totalorder %s1134, %s1127
                %s1139 = sphi 0, %s1146
                %s1140 = sphi %s1130, %s1149
                %s1141 = sphi %s1132, %s1150
              $region82: #{tpu_custom_call.1} parent=71 // loop_header_branch
                %1138 = sbr.rel (%p1135) target = $region86
              $region83: #{tpu_custom_call.1} parent=71 // loop_body
                %v1142 = vld [vmem:[%s1140] sm:%s1081]
                %1143 = vst [vmem:[%s1141] sm:%s1081] %v1142
                %s1144 = sadd.s32 1, %s1139
                %p1145 = scmp.ge.s32.totalorder %s1144, %s1127
                %s1146 = scalar_select %p1145, 0, %s1144
                %s1147 = smul.u32 %s1146, 8
                %s1148 = smul.u32 %s1146, 8
                %s1149 = scalar_lea.vmem %s1130, %s1147 [#allocation2]
                %s1150 = scalar_lea.vmem %s1132, %s1148
              $region84: #{tpu_custom_call.1} parent=71 // loop_footer
                %s1136 = sadd.s32 %s1134, 1
              $region85: #{tpu_custom_call.1} parent=71 // loop_footer_branch
                %1133 = sbr.rel target = $region81
              $region86: #{tpu_custom_call.1} parent=71 // loop_exit
                _
            $region72: #{tpu_custom_call.1} parent=63 // pred_fallthru
              _
          $region64: #{tpu_custom_call.1} parent=59 // pred_fallthru
            _
          %1224 = vnop
        $region60: #{tpu_custom_call.1} parent=55 // pred_fallthru
          _
      $region56: #{tpu_custom_call.1} parent=5 // pred_fallthru
        _
      %p1225 = scmp.le.s32.totalorder 2, %s15
      // Predicated region
      $region109: #{tpu_custom_call.1} parent=5 // pred_check
        %p1226 = pneg %p1225
      $region110: #{tpu_custom_call.1} parent=5 // pred_check_branch
        %1228 = sbr.rel (%p1226) target = $region112
      $region111: #{tpu_custom_call.1} parent=5 // pred_region
        %s1229 = ssub.s32 %s15, 2
        // Predicated region
        $region113: #{tpu_custom_call.1} parent=111 // pred_check
          %p1230 = pneg %p243
        $region114: #{tpu_custom_call.1} parent=111 // pred_check_branch
          %1232 = sbr.rel (%p1230) target = $region116
        $region115: #{tpu_custom_call.1} parent=111 // pred_region
          %s1233 = sand.u32 %s228, 1
          %s1234 = sand.u32 %s228, 1
          %s1235 = smul.addr %s1234, 104
          %s1236 = scalar_lea.vmem [#allocation2], %s1235
        $region116: #{tpu_custom_call.1} parent=111 // pred_fallthru
          _
      $region112: #{tpu_custom_call.1} parent=5 // pred_fallthru
        _
    $region6: #{tpu_custom_call.1} parent=1 // loop_footer
      %s19 = sadd.s32 1, %s15
    $region7: #{tpu_custom_call.1} parent=1 // loop_footer_branch
      %14 = sbr.rel target = $region3
    $region8: #{tpu_custom_call.1} parent=1 // loop_exit
      _

</llo_original>
